<compile_context>
chip_gen: v6e
topology: v6e:2x2x1
jax: 0.10.0
libtpu: 0.0.40
codegen_flags: <defaults>
</compile_context>

<pallas_src>
import functools

import jax
import jax.numpy as jnp
from jax import lax
from jax.experimental import pallas as pl
from jax.experimental.pallas import tpu as pltpu


# ------------------------------- fused kernel --------------------------------

def _attnpool_kernel(tok_ref, wkv_ref, bkv_ref, wq_ref, bq_ref, wc_ref, bc_ref,
                     o_ref, *, heads, scale):
    """One grid step = one batch element; everything stays in VMEM/vregs.

    tok_ref: (1, L, C) bf16  tokens (row 0 = mean token), pos-emb already added
    wkv_ref: (C, 2C)   bf16  [Wk | Wv]          bkv_ref: (1, 2C) f32
    wq_ref : (C, C)    bf16                      bq_ref : (1, C)  f32
    wc_ref : (C, out)  bf16                      bc_ref : (1, out) f32
    o_ref  : (1, 1, out) f32
    """
    x = tok_ref[0]                                  # (L, C) bf16
    L, C = x.shape
    dh = C // heads

    # Fused K|V projection for this batch element (bf16 MXU, f32 accumulate).
    kv = jnp.dot(x, wkv_ref[...],
                 preferred_element_type=jnp.float32) + bkv_ref[...]      # (L, 2C)

    # Query projection: only the token-0 (mean-token) row is ever needed.
    q = (jnp.dot(x[0:1, :], wq_ref[...],
                 preferred_element_type=jnp.float32) + bq_ref[...]) * scale
    q = q.astype(jnp.bfloat16)                      # (1, C)

    # Per-head attention of the single query token against all L keys.
    head_outs = []
    for h in range(heads):                          # heads is static -> unrolled
        lo = h * dh
        q_h = q[:, lo:lo + dh]                                   # (1, dh) bf16
        k_h = kv[:, lo:lo + dh].astype(jnp.bfloat16)             # (L, dh) bf16
        v_h = kv[:, C + lo:C + lo + dh].astype(jnp.bfloat16)     # (L, dh) bf16
        # scores: contract over dh directly (no k^T materialized)
        s = lax.dot_general(q_h, k_h, (((1,), (1,)), ((), ())),
                            preferred_element_type=jnp.float32)  # (1, L) f32
        s = s - jnp.max(s, axis=-1, keepdims=True)
        p = jnp.exp(s)                                           # f32 softmax
        p = p * pl.reciprocal(jnp.sum(p, axis=-1, keepdims=True), approx=True)
        head_outs.append(jnp.dot(p.astype(jnp.bfloat16), v_h,
                                 preferred_element_type=jnp.float32))   # (1, dh)

    attn = jnp.concatenate(head_outs, axis=-1).astype(jnp.bfloat16)     # (1, C)

    # Fused c_proj epilogue.
    y = jnp.dot(attn, wc_ref[...],
                preferred_element_type=jnp.float32) + bc_ref[...]       # (1, out)
    o_ref[0] = y.astype(o_ref.dtype)


# ------------------------------- forward pass ---------------------------------

def attention_pool_forward(x_nchw, kp, heads):
    """x_nchw: (N, C, H, W) -> (N, output_dim).  Matches AttentionPool2d.forward."""
    x = x_nchw.astype(jnp.float32)
    n, c, h, w = x.shape
    hw = h * w
    L = hw + 1
    assert c % heads == 0
    dh = c // heads
    out_dim = kp['c_w'].shape[1]

    # (N,C,H,W) -> (N,HW,C); prepend mean token; add positional embedding (f32),
    # then one cast to bf16 for the MXU (accumulation stays f32 inside the kernel).
    tokens = jnp.transpose(x.reshape(n, c, hw), (0, 2, 1))               # (N,HW,C)
    tok = jnp.concatenate([jnp.mean(tokens, axis=1, keepdims=True), tokens], axis=1)
    tok = (tok + kp['pos_emb'][None, :, :]).astype(jnp.bfloat16)         # (N, L, C)

    kernel = functools.partial(_attnpool_kernel, heads=heads, scale=dh ** -0.5)

    out = pl.pallas_call(
        kernel,
        out_shape=jax.ShapeDtypeStruct((n, 1, out_dim), jnp.float32),
        grid_spec=pltpu.PrefetchScalarGridSpec(
            num_scalar_prefetch=0,
            grid=(n,),
            in_specs=[
                pl.BlockSpec((1, L, c), lambda b: (b, 0, 0)),     # this batch's tokens
                pl.BlockSpec((c, 2 * c), lambda b: (0, 0)),       # W_kv   (resident)
                pl.BlockSpec((1, 2 * c), lambda b: (0, 0)),       # b_kv
                pl.BlockSpec((c, c), lambda b: (0, 0)),           # W_q
                pl.BlockSpec((1, c), lambda b: (0, 0)),           # b_q
                pl.BlockSpec((c, out_dim), lambda b: (0, 0)),     # W_c
                pl.BlockSpec((1, out_dim), lambda b: (0, 0)),     # b_c
            ],
            out_specs=pl.BlockSpec((1, 1, out_dim), lambda b: (b, 0, 0)),
        ),
        compiler_params=pltpu.CompilerParams(
            dimension_semantics=("parallel",)),                   # both TCs on v7x
    )(tok, kp['kv_w'], kp['kv_b'], kp['q_w'], kp['q_b'], kp['c_w'], kp['c_b'])

    return out.reshape(n, out_dim)


# ------------------------------ parameters ------------------------------------

def init_params(key, spacial_dim, embed_dim, output_dim):
    ks = jax.random.split(key, 5)

    def lin(k, cin, cout):
        kw, kb = jax.random.split(k)
        wgt = jax.random.normal(kw, (cin, cout), jnp.float32) * (cin ** -0.5)
        bias = 0.02 * jax.random.normal(kb, (cout,), jnp.float32)
        return wgt, bias

    p = {}
    p['pos_emb'] = (jax.random.normal(
        ks[0], (spacial_dim[0] * spacial_dim[1] + 1, embed_dim), jnp.float32)
        / embed_dim ** 0.5)
    p['q_w'], p['q_b'] = lin(ks[1], embed_dim, embed_dim)
    p['k_w'], p['k_b'] = lin(ks[2], embed_dim, embed_dim)
    p['v_w'], p['v_b'] = lin(ks[3], embed_dim, embed_dim)
    p['c_w'], p['c_b'] = lin(ks[4], embed_dim, output_dim)
    return p


def prepare_kernel_params(p):
    """One-time (outside jit / forward) weight fusion + bf16 cast of MXU operands."""
    return {
        'pos_emb': p['pos_emb'],                                               # f32
        'kv_w': jnp.concatenate([p['k_w'], p['v_w']], axis=1).astype(jnp.bfloat16),
        'kv_b': jnp.concatenate([p['k_b'], p['v_b']]).reshape(1, -1),          # f32
        'q_w': p['q_w'].astype(jnp.bfloat16),
        'q_b': p['q_b'].reshape(1, -1),
        'c_w': p['c_w'].astype(jnp.bfloat16),
        'c_b': p['c_b'].reshape(1, -1),
    }


# --------------------------- pure-JAX f32 reference ----------------------------

def reference_forward(x_nchw, p, heads):
    """Matches AttentionPool2d.forward (returns x[0]) in f32."""
    x = x_nchw.astype(jnp.float32)
    n, c, h, w = x.shape
    hw = h * w
    L = hw + 1
    dh = c // heads
    tokens = jnp.transpose(x.reshape(n, c, hw), (0, 2, 1))
    tok = jnp.concatenate([jnp.mean(tokens, axis=1, keepdims=True), tokens], axis=1)
    tok = tok + p['pos_emb'][None]
    q = (tok[:, :1] @ p['q_w'] + p['q_b']) * dh ** -0.5                    # (N,1,C)
    k = tok @ p['k_w'] + p['k_b']                                          # (N,L,C)
    v = tok @ p['v_w'] + p['v_b']
    qh = q.reshape(n, 1, heads, dh).transpose(0, 2, 1, 3)
    kh = k.reshape(n, L, heads, dh).transpose(0, 2, 1, 3)
    vh = v.reshape(n, L, heads, dh).transpose(0, 2, 1, 3)
    s = jnp.einsum('nhqd,nhkd->nhqk', qh, kh)
    a = jax.nn.softmax(s, axis=-1)
    o = jnp.einsum('nhqk,nhkd->nhqd', a, vh)
    o = o.transpose(0, 2, 1, 3).reshape(n, c)
    return o @ p['c_w'] + p['c_b']


# ----------------------------------- main --------------------------------------

if __name__ == "__main__":
    SPACIAL = (8, 8)     # H, W of the feature map  -> L = 65 tokens
    EMBED_DIM = 64
    HEADS = 4            # head_dim = 16
    OUTPUT_DIM = 32
    BATCH = 2

    key = jax.random.PRNGKey(0)
    kparam, kx = jax.random.split(key)
    params = init_params(kparam, SPACIAL, EMBED_DIM, OUTPUT_DIM)
    kernel_params = prepare_kernel_params(params)          # once, outside the jit
    x = jax.random.normal(kx, (BATCH, EMBED_DIM, SPACIAL[0], SPACIAL[1]), jnp.float32)

    fwd = jax.jit(functools.partial(attention_pool_forward, heads=HEADS))
    out = jax.block_until_ready(fwd(x, kernel_params))

    assert out.shape == (BATCH, OUTPUT_DIM), out.shape
    assert bool(jnp.all(jnp.isfinite(out)))

    ref = reference_forward(x, params, HEADS)
    err = float(jnp.max(jnp.abs(out - ref)))
    assert err < 0.1, f"max abs error vs f32 reference too large: {err}"

    print("KERNEL_OK")
</pallas_src>

<mosaic_0001>
module attributes {stable_mosaic.version = 11 : i64} {
  func.func @_attnpool_kernel(%arg0: i32, %arg1: memref<1x65x64xbf16, #tpu.memory_space<vmem>>, %arg2: memref<64x128xbf16, #tpu.memory_space<vmem>>, %arg3: memref<1x128xf32, #tpu.memory_space<vmem>>, %arg4: memref<64x64xbf16, #tpu.memory_space<vmem>>, %arg5: memref<1x64xf32, #tpu.memory_space<vmem>>, %arg6: memref<64x32xbf16, #tpu.memory_space<vmem>>, %arg7: memref<1x32xf32, #tpu.memory_space<vmem>>, %arg8: memref<1x1x32xf32, #tpu.memory_space<vmem>>) attributes {dimension_semantics = [#tpu.dimension_semantics<parallel>], iteration_bounds = array<i64: 2>, scalar_prefetch = 0 : i64, scratch_operands = 0 : i64, tpu.core_type = #tpu.core_type<tc>, window_params = [{transform_indices = @transform_0, window_bounds = array<i64: 1, 65, 64>}, {pipeline_mode = #tpu.pipeline_mode<synchronous>, transform_indices = @transform_1, window_bounds = array<i64: 64, 128>}, {pipeline_mode = #tpu.pipeline_mode<synchronous>, transform_indices = @transform_2, window_bounds = array<i64: 1, 128>}, {pipeline_mode = #tpu.pipeline_mode<synchronous>, transform_indices = @transform_3, window_bounds = array<i64: 64, 64>}, {pipeline_mode = #tpu.pipeline_mode<synchronous>, transform_indices = @transform_4, window_bounds = array<i64: 1, 64>}, {pipeline_mode = #tpu.pipeline_mode<synchronous>, transform_indices = @transform_5, window_bounds = array<i64: 64, 32>}, {pipeline_mode = #tpu.pipeline_mode<synchronous>, transform_indices = @transform_6, window_bounds = array<i64: 1, 32>}, {transform_indices = @transform_7, window_bounds = array<i64: 1, 1, 32>}]} {
    %c0 = arith.constant 0 : index
    %c0_0 = arith.constant 0 : index
    %c0_1 = arith.constant 0 : index
    %0 = vector.load %arg1[%c0, %c0_0, %c0_1] : memref<1x65x64xbf16, #tpu.memory_space<vmem>>, vector<1x65x64xbf16>
    %1 = vector.shape_cast %0 : vector<1x65x64xbf16> to vector<65x64xbf16>
    %c0_2 = arith.constant 0 : index
    %c0_3 = arith.constant 0 : index
    %2 = vector.load %arg2[%c0_2, %c0_3] : memref<64x128xbf16, #tpu.memory_space<vmem>>, vector<64x128xbf16>
    %cst = arith.constant dense<0.000000e+00> : vector<65x128xf32>
    %3 = tpu.matmul %1, %2, %cst {dimension_numbers = #tpu.dot_dimension_numbers<[1], [0], [0], [1], [0, 0, 1, 1], [], []>} : vector<65x64xbf16>, vector<64x128xbf16>, vector<65x128xf32> -> vector<65x128xf32>
    %c0_4 = arith.constant 0 : index
    %c0_5 = arith.constant 0 : index
    %4 = vector.load %arg3[%c0_4, %c0_5] : memref<1x128xf32, #tpu.memory_space<vmem>>, vector<1x128xf32>
    %5 = vector.broadcast %4 : vector<1x128xf32> to vector<65x128xf32>
    %6 = arith.addf %3, %5 : vector<65x128xf32>
    %7 = vector.extract_strided_slice %1 {offsets = [0, 0], sizes = [1, 64], strides = [1, 1]} : vector<65x64xbf16> to vector<1x64xbf16>
    %c0_6 = arith.constant 0 : index
    %c0_7 = arith.constant 0 : index
    %8 = vector.load %arg4[%c0_6, %c0_7] : memref<64x64xbf16, #tpu.memory_space<vmem>>, vector<64x64xbf16>
    %cst_8 = arith.constant dense<0.000000e+00> : vector<1x64xf32>
    %9 = tpu.matmul %7, %8, %cst_8 {dimension_numbers = #tpu.dot_dimension_numbers<[1], [0], [0], [1], [0, 0, 1, 1], [], []>} : vector<1x64xbf16>, vector<64x64xbf16>, vector<1x64xf32> -> vector<1x64xf32>
    %c0_9 = arith.constant 0 : index
    %c0_10 = arith.constant 0 : index
    %10 = vector.load %arg5[%c0_9, %c0_10] : memref<1x64xf32, #tpu.memory_space<vmem>>, vector<1x64xf32>
    %11 = arith.addf %9, %10 : vector<1x64xf32>
    %cst_11 = arith.constant 2.500000e-01 : f32
    %12 = vector.broadcast %cst_11 : f32 to vector<1x64xf32>
    %13 = arith.mulf %11, %12 : vector<1x64xf32>
    %14 = arith.truncf %13 : vector<1x64xf32> to vector<1x64xbf16>
    %15 = vector.extract_strided_slice %14 {offsets = [0, 0], sizes = [1, 16], strides = [1, 1]} : vector<1x64xbf16> to vector<1x16xbf16>
    %16 = vector.extract_strided_slice %6 {offsets = [0, 0], sizes = [65, 16], strides = [1, 1]} : vector<65x128xf32> to vector<65x16xf32>
    %17 = arith.truncf %16 : vector<65x16xf32> to vector<65x16xbf16>
    %18 = vector.extract_strided_slice %6 {offsets = [0, 64], sizes = [65, 16], strides = [1, 1]} : vector<65x128xf32> to vector<65x16xf32>
    %19 = arith.truncf %18 : vector<65x16xf32> to vector<65x16xbf16>
    %cst_12 = arith.constant dense<0.000000e+00> : vector<1x65xf32>
    %20 = tpu.matmul %15, %17, %cst_12 {dimension_numbers = #tpu.dot_dimension_numbers<[1], [1], [0], [0], [0, 0, 1, 0], [], []>} : vector<1x16xbf16>, vector<65x16xbf16>, vector<1x65xf32> -> vector<1x65xf32>
    %cst_13 = arith.constant dense<0xFF800000> : vector<1xf32>
    %21 = vector.multi_reduction <maximumf>, %20, %cst_13 [1] : vector<1x65xf32> to vector<1xf32>
    %22 = vector.shape_cast %21 : vector<1xf32> to vector<1x1xf32>
    %23 = vector.broadcast %22 : vector<1x1xf32> to vector<1x65xf32>
    %24 = arith.subf %20, %23 : vector<1x65xf32>
    %25 = math.exp %24 : vector<1x65xf32>
    %cst_14 = arith.constant dense<0.000000e+00> : vector<1xf32>
    %26 = vector.multi_reduction <add>, %25, %cst_14 [1] : vector<1x65xf32> to vector<1xf32>
    %27 = vector.shape_cast %26 : vector<1xf32> to vector<1x1xf32>
    %28 = tpu.reciprocal %27 {approx = true} : vector<1x1xf32> -> vector<1x1xf32>
    %29 = vector.broadcast %28 : vector<1x1xf32> to vector<1x65xf32>
    %30 = arith.mulf %25, %29 : vector<1x65xf32>
    %31 = arith.truncf %30 : vector<1x65xf32> to vector<1x65xbf16>
    %cst_15 = arith.constant dense<0.000000e+00> : vector<1x16xf32>
    %32 = tpu.matmul %31, %19, %cst_15 {dimension_numbers = #tpu.dot_dimension_numbers<[1], [0], [0], [1], [0, 0, 1, 1], [], []>} : vector<1x65xbf16>, vector<65x16xbf16>, vector<1x16xf32> -> vector<1x16xf32>
    %33 = vector.extract_strided_slice %14 {offsets = [0, 16], sizes = [1, 16], strides = [1, 1]} : vector<1x64xbf16> to vector<1x16xbf16>
    %34 = vector.extract_strided_slice %6 {offsets = [0, 16], sizes = [65, 16], strides = [1, 1]} : vector<65x128xf32> to vector<65x16xf32>
    %35 = arith.truncf %34 : vector<65x16xf32> to vector<65x16xbf16>
    %36 = vector.extract_strided_slice %6 {offsets = [0, 80], sizes = [65, 16], strides = [1, 1]} : vector<65x128xf32> to vector<65x16xf32>
    %37 = arith.truncf %36 : vector<65x16xf32> to vector<65x16xbf16>
    %cst_16 = arith.constant dense<0.000000e+00> : vector<1x65xf32>
    %38 = tpu.matmul %33, %35, %cst_16 {dimension_numbers = #tpu.dot_dimension_numbers<[1], [1], [0], [0], [0, 0, 1, 0], [], []>} : vector<1x16xbf16>, vector<65x16xbf16>, vector<1x65xf32> -> vector<1x65xf32>
    %cst_17 = arith.constant dense<0xFF800000> : vector<1xf32>
    %39 = vector.multi_reduction <maximumf>, %38, %cst_17 [1] : vector<1x65xf32> to vector<1xf32>
    %40 = vector.shape_cast %39 : vector<1xf32> to vector<1x1xf32>
    %41 = vector.broadcast %40 : vector<1x1xf32> to vector<1x65xf32>
    %42 = arith.subf %38, %41 : vector<1x65xf32>
    %43 = math.exp %42 : vector<1x65xf32>
    %cst_18 = arith.constant dense<0.000000e+00> : vector<1xf32>
    %44 = vector.multi_reduction <add>, %43, %cst_18 [1] : vector<1x65xf32> to vector<1xf32>
    %45 = vector.shape_cast %44 : vector<1xf32> to vector<1x1xf32>
    %46 = tpu.reciprocal %45 {approx = true} : vector<1x1xf32> -> vector<1x1xf32>
    %47 = vector.broadcast %46 : vector<1x1xf32> to vector<1x65xf32>
    %48 = arith.mulf %43, %47 : vector<1x65xf32>
    %49 = arith.truncf %48 : vector<1x65xf32> to vector<1x65xbf16>
    %cst_19 = arith.constant dense<0.000000e+00> : vector<1x16xf32>
    %50 = tpu.matmul %49, %37, %cst_19 {dimension_numbers = #tpu.dot_dimension_numbers<[1], [0], [0], [1], [0, 0, 1, 1], [], []>} : vector<1x65xbf16>, vector<65x16xbf16>, vector<1x16xf32> -> vector<1x16xf32>
    %51 = vector.extract_strided_slice %14 {offsets = [0, 32], sizes = [1, 16], strides = [1, 1]} : vector<1x64xbf16> to vector<1x16xbf16>
    %52 = vector.extract_strided_slice %6 {offsets = [0, 32], sizes = [65, 16], strides = [1, 1]} : vector<65x128xf32> to vector<65x16xf32>
    %53 = arith.truncf %52 : vector<65x16xf32> to vector<65x16xbf16>
    %54 = vector.extract_strided_slice %6 {offsets = [0, 96], sizes = [65, 16], strides = [1, 1]} : vector<65x128xf32> to vector<65x16xf32>
    %55 = arith.truncf %54 : vector<65x16xf32> to vector<65x16xbf16>
    %cst_20 = arith.constant dense<0.000000e+00> : vector<1x65xf32>
    %56 = tpu.matmul %51, %53, %cst_20 {dimension_numbers = #tpu.dot_dimension_numbers<[1], [1], [0], [0], [0, 0, 1, 0], [], []>} : vector<1x16xbf16>, vector<65x16xbf16>, vector<1x65xf32> -> vector<1x65xf32>
    %cst_21 = arith.constant dense<0xFF800000> : vector<1xf32>
    %57 = vector.multi_reduction <maximumf>, %56, %cst_21 [1] : vector<1x65xf32> to vector<1xf32>
    %58 = vector.shape_cast %57 : vector<1xf32> to vector<1x1xf32>
    %59 = vector.broadcast %58 : vector<1x1xf32> to vector<1x65xf32>
    %60 = arith.subf %56, %59 : vector<1x65xf32>
    %61 = math.exp %60 : vector<1x65xf32>
    %cst_22 = arith.constant dense<0.000000e+00> : vector<1xf32>
    %62 = vector.multi_reduction <add>, %61, %cst_22 [1] : vector<1x65xf32> to vector<1xf32>
    %63 = vector.shape_cast %62 : vector<1xf32> to vector<1x1xf32>
    %64 = tpu.reciprocal %63 {approx = true} : vector<1x1xf32> -> vector<1x1xf32>
    %65 = vector.broadcast %64 : vector<1x1xf32> to vector<1x65xf32>
    %66 = arith.mulf %61, %65 : vector<1x65xf32>
    %67 = arith.truncf %66 : vector<1x65xf32> to vector<1x65xbf16>
    %cst_23 = arith.constant dense<0.000000e+00> : vector<1x16xf32>
    %68 = tpu.matmul %67, %55, %cst_23 {dimension_numbers = #tpu.dot_dimension_numbers<[1], [0], [0], [1], [0, 0, 1, 1], [], []>} : vector<1x65xbf16>, vector<65x16xbf16>, vector<1x16xf32> -> vector<1x16xf32>
    %69 = vector.extract_strided_slice %14 {offsets = [0, 48], sizes = [1, 16], strides = [1, 1]} : vector<1x64xbf16> to vector<1x16xbf16>
    %70 = vector.extract_strided_slice %6 {offsets = [0, 48], sizes = [65, 16], strides = [1, 1]} : vector<65x128xf32> to vector<65x16xf32>
    %71 = arith.truncf %70 : vector<65x16xf32> to vector<65x16xbf16>
    %72 = vector.extract_strided_slice %6 {offsets = [0, 112], sizes = [65, 16], strides = [1, 1]} : vector<65x128xf32> to vector<65x16xf32>
    %73 = arith.truncf %72 : vector<65x16xf32> to vector<65x16xbf16>
    %cst_24 = arith.constant dense<0.000000e+00> : vector<1x65xf32>
    %74 = tpu.matmul %69, %71, %cst_24 {dimension_numbers = #tpu.dot_dimension_numbers<[1], [1], [0], [0], [0, 0, 1, 0], [], []>} : vector<1x16xbf16>, vector<65x16xbf16>, vector<1x65xf32> -> vector<1x65xf32>
    %cst_25 = arith.constant dense<0xFF800000> : vector<1xf32>
    %75 = vector.multi_reduction <maximumf>, %74, %cst_25 [1] : vector<1x65xf32> to vector<1xf32>
    %76 = vector.shape_cast %75 : vector<1xf32> to vector<1x1xf32>
    %77 = vector.broadcast %76 : vector<1x1xf32> to vector<1x65xf32>
    %78 = arith.subf %74, %77 : vector<1x65xf32>
    %79 = math.exp %78 : vector<1x65xf32>
    %cst_26 = arith.constant dense<0.000000e+00> : vector<1xf32>
    %80 = vector.multi_reduction <add>, %79, %cst_26 [1] : vector<1x65xf32> to vector<1xf32>
    %81 = vector.shape_cast %80 : vector<1xf32> to vector<1x1xf32>
    %82 = tpu.reciprocal %81 {approx = true} : vector<1x1xf32> -> vector<1x1xf32>
    %83 = vector.broadcast %82 : vector<1x1xf32> to vector<1x65xf32>
    %84 = arith.mulf %79, %83 : vector<1x65xf32>
    %85 = arith.truncf %84 : vector<1x65xf32> to vector<1x65xbf16>
    %cst_27 = arith.constant dense<0.000000e+00> : vector<1x16xf32>
    %86 = tpu.matmul %85, %73, %cst_27 {dimension_numbers = #tpu.dot_dimension_numbers<[1], [0], [0], [1], [0, 0, 1, 1], [], []>} : vector<1x65xbf16>, vector<65x16xbf16>, vector<1x16xf32> -> vector<1x16xf32>
    %87 = tpu.concatenate %32, %50, %68, %86 in 1 : vector<1x16xf32>, vector<1x16xf32>, vector<1x16xf32>, vector<1x16xf32> -> vector<1x64xf32>
    %88 = arith.truncf %87 : vector<1x64xf32> to vector<1x64xbf16>
    %c0_28 = arith.constant 0 : index
    %c0_29 = arith.constant 0 : index
    %89 = vector.load %arg6[%c0_28, %c0_29] : memref<64x32xbf16, #tpu.memory_space<vmem>>, vector<64x32xbf16>
    %cst_30 = arith.constant dense<0.000000e+00> : vector<1x32xf32>
    %90 = tpu.matmul %88, %89, %cst_30 {dimension_numbers = #tpu.dot_dimension_numbers<[1], [0], [0], [1], [0, 0, 1, 1], [], []>} : vector<1x64xbf16>, vector<64x32xbf16>, vector<1x32xf32> -> vector<1x32xf32>
    %c0_31 = arith.constant 0 : index
    %c0_32 = arith.constant 0 : index
    %91 = vector.load %arg7[%c0_31, %c0_32] : memref<1x32xf32, #tpu.memory_space<vmem>>, vector<1x32xf32>
    %92 = arith.addf %90, %91 : vector<1x32xf32>
    %c0_33 = arith.constant 0 : index
    %c0_34 = arith.constant 0 : index
    %c0_35 = arith.constant 0 : index
    %93 = vector.load %arg8[%c0_33, %c0_34, %c0_35] : memref<1x1x32xf32, #tpu.memory_space<vmem>>, vector<1x1x32xf32>
    %94 = vector.shape_cast %93 : vector<1x1x32xf32> to vector<1x32xf32>
    %95 = vector.shape_cast %92 : vector<1x32xf32> to vector<1x1x32xf32>
    tpu.vector_store %arg8[%c0_33, %c0_34, %c0_35], %95 {strides = array<i32>} : memref<1x1x32xf32, #tpu.memory_space<vmem>>, vector<1x1x32xf32>,
    return
  }
  func.func @transform_0(%arg0: i32) -> (i32, i32, i32) {
    %c0_i32 = arith.constant 0 : i32
    %c0_i32_0 = arith.constant 0 : i32
    %c0_i32_1 = arith.constant 0 : i32
    return %arg0, %c0_i32, %c0_i32_0 : i32, i32, i32
  }
  func.func @transform_1(%arg0: i32) -> (i32, i32) {
    %c0_i32 = arith.constant 0 : i32
    %c0_i32_0 = arith.constant 0 : i32
    %c0_i32_1 = arith.constant 0 : i32
    return %c0_i32, %c0_i32_0 : i32, i32
  }
  func.func @transform_2(%arg0: i32) -> (i32, i32) {
    %c0_i32 = arith.constant 0 : i32
    %c0_i32_0 = arith.constant 0 : i32
    %c0_i32_1 = arith.constant 0 : i32
    return %c0_i32, %c0_i32_0 : i32, i32
  }
  func.func @transform_3(%arg0: i32) -> (i32, i32) {
    %c0_i32 = arith.constant 0 : i32
    %c0_i32_0 = arith.constant 0 : i32
    %c0_i32_1 = arith.constant 0 : i32
    return %c0_i32, %c0_i32_0 : i32, i32
  }
  func.func @transform_4(%arg0: i32) -> (i32, i32) {
    %c0_i32 = arith.constant 0 : i32
    %c0_i32_0 = arith.constant 0 : i32
    %c0_i32_1 = arith.constant 0 : i32
    return %c0_i32, %c0_i32_0 : i32, i32
  }
  func.func @transform_5(%arg0: i32) -> (i32, i32) {
    %c0_i32 = arith.constant 0 : i32
    %c0_i32_0 = arith.constant 0 : i32
    %c0_i32_1 = arith.constant 0 : i32
    return %c0_i32, %c0_i32_0 : i32, i32
  }
  func.func @transform_6(%arg0: i32) -> (i32, i32) {
    %c0_i32 = arith.constant 0 : i32
    %c0_i32_0 = arith.constant 0 : i32
    %c0_i32_1 = arith.constant 0 : i32
    return %c0_i32, %c0_i32_0 : i32, i32
  }
  func.func @transform_7(%arg0: i32) -> (i32, i32, i32) {
    %c0_i32 = arith.constant 0 : i32
    %c0_i32_0 = arith.constant 0 : i32
    %c0_i32_1 = arith.constant 0 : i32
    return %arg0, %c0_i32, %c0_i32_0 : i32, i32, i32
  }
}

</mosaic_0001>

<llo_original>
// kernel: attention_pool_forward.1
$region0: #{attention_pool_forward.1}
  #allocation0 [shape = 'u32[]', space=smem, size = 0x4, offset = 0x4, fixed_abs, tag = 'smem constant byte address 0x4 - core index']
  #allocation1 [shape = 'u32[144,128]{1,0:T(1,128)}', space=vmem, size = 0x12000, scoped, tag = 'internal scratch']
  %s0 = inlined_call_operand.vmem [shape: bf16[2,65,64], index: 0, kind: input, shape index: {}]
  %s1 = inlined_call_operand.vmem [shape: bf16[64,128], index: 1, kind: input, shape index: {}]
  %s2 = inlined_call_operand.vmem [shape: f32[1,128], index: 2, kind: input, shape index: {}]
  %s3 = inlined_call_operand.vmem [shape: bf16[64,64], index: 3, kind: input, shape index: {}]
  %s4 = inlined_call_operand.vmem [shape: f32[1,64], index: 4, kind: input, shape index: {}]
  %s5 = inlined_call_operand.vmem [shape: bf16[64,32], index: 5, kind: input, shape index: {}]
  %s6 = inlined_call_operand.vmem [shape: f32[1,32], index: 6, kind: input, shape index: {}]
  %s7 = inlined_call_operand.hbm [shape: f32[2,1,32], index: 7, kind: output, shape index: {}]
  %s8 = sld [smem:[#allocation0]]
  $region61: #{attention_pool_forward.1} parent=0
    _
  %s10 = ssub.s32 1, %s8
  %s11 = scalar_select 0, %s10, %s8
  $region1: #{attention_pool_forward.1} parent=0
    #allocation2 [shape = 'u8[1024]{0}', space=vmem, size = 0x400, scoped, tag = 'output window, operand 0']
    #allocation3 [shape = 's32[2]{0}', space=sflag, size = 0x8, scoped, tag = 'scoped memory for attention_pool_forward.1']
    %12 = vsyncpa [#allocation3], 0
    %s13 = scalar_lea.sflag [#allocation3], 1
    %14 = vsyncpa %s13, 0
    loop: start=0, step=1, limit=4
    $region2: #{attention_pool_forward.1} parent=1 // loop_pre_header
      _
    $region3: #{attention_pool_forward.1} parent=1 // loop_header
      %s16 = sphi 0, %s20
      %p17 = scmp.ge.s32.totalorder %s16, 4
      %s26 = sphi 0, %s28
      %s29 = sphi 0, %s26
      %s30 = sphi 0, %s29
      %s46 = sphi 0, %s30
      %s50 = sphi 0, %s50
      %s52 = sphi 0, %s50
      %s53 = sphi 0, %s52
      %s67 = sphi 0, %s53
      %s71 = sphi 0, %s71
      %s73 = sphi 0, %s71
      %s74 = sphi 0, %s73
      %s88 = sphi 0, %s74
      %s92 = sphi 0, %s92
      %s94 = sphi 0, %s92
      %s95 = sphi 0, %s94
      %s109 = sphi 0, %s95
      %s113 = sphi 0, %s113
      %s115 = sphi 0, %s113
      %s116 = sphi 0, %s115
      %s130 = sphi 0, %s116
      %s134 = sphi 0, %s134
      %s136 = sphi 0, %s134
      %s137 = sphi 0, %s136
      %s151 = sphi 0, %s137
      %s155 = sphi 0, %s155
      %s157 = sphi 0, %s155
      %s158 = sphi 0, %s157
      %s172 = sphi 0, %s158
      %s178 = sphi 0, %s180
      %s181 = sphi 0, %s178
      %s182 = sphi 0, %s181
      %s198 = sphi 0, %s182
    $region4: #{attention_pool_forward.1} parent=1 // loop_header_branch
      %19 = sbr.rel (%p17) target = $region8
    $region5: #{attention_pool_forward.1} parent=1 // loop_body
      %s21 = ssub.s32 %s16, 1
      %s22 = ssub.s32 %s16, 2
      %s23 = sadd.s32 %s16, 1
      %s24 = ssub.s32 %s16, %s23
      %p25 = scmp.eq.s32.totalorder %s24, 0
      %s27 = sadd.s32 %s26, 1
      %s28 = scalar_select %p25, %s26, %s27
      %p31 = pneg %p25
      %p32 = scmp.eq.s32.totalorder %s16, 1
      %p33 = por %p31, %p32
      %p34 = scmp.ne.s32.totalorder %s26, %s29
      %p35 = scmp.eq.s32.totalorder %s16, 0
      %p36 = por %p34, %p35
      %p37 = scmp.ne.s32.totalorder %s26, %s29
      %p38 = scmp.eq.s32.totalorder %s21, 1
      %p39 = por %p37, %p38
      %p40 = scmp.ne.s32.totalorder %s29, %s30
      %p41 = scmp.eq.s32.totalorder %s21, 0
      %p42 = por %p40, %p41
      %p43 = scmp.ne.s32.totalorder %s29, %s30
      %p44 = scmp.eq.s32.totalorder %s22, 1
      %p45 = por %p43, %p44
      %p47 = scmp.ne.s32.totalorder %s30, %s46
      %p48 = scmp.eq.s32.totalorder %s22, 0
      %p49 = por %p47, %p48
      %s51 = sadd.s32 %s50, 1
      %p54 = scmp.eq.s32.totalorder %s16, 1
      %p55 = scmp.ne.s32.totalorder %s50, %s52
      %p56 = scmp.eq.s32.totalorder %s16, 0
      %p57 = por %p55, %p56
      %p58 = scmp.ne.s32.totalorder %s50, %s52
      %p59 = scmp.eq.s32.totalorder %s21, 1
      %p60 = por %p58, %p59
      %p61 = scmp.ne.s32.totalorder %s52, %s53
      %p62 = scmp.eq.s32.totalorder %s21, 0
      %p63 = por %p61, %p62
      %p64 = scmp.ne.s32.totalorder %s52, %s53
      %p65 = scmp.eq.s32.totalorder %s22, 1
      %p66 = por %p64, %p65
      %p68 = scmp.ne.s32.totalorder %s53, %s67
      %p69 = scmp.eq.s32.totalorder %s22, 0
      %p70 = por %p68, %p69
      %s72 = sadd.s32 %s71, 1
      %p75 = scmp.eq.s32.totalorder %s16, 1
      %p76 = scmp.ne.s32.totalorder %s71, %s73
      %p77 = scmp.eq.s32.totalorder %s16, 0
      %p78 = por %p76, %p77
      %p79 = scmp.ne.s32.totalorder %s71, %s73
      %p80 = scmp.eq.s32.totalorder %s21, 1
      %p81 = por %p79, %p80
      %p82 = scmp.ne.s32.totalorder %s73, %s74
      %p83 = scmp.eq.s32.totalorder %s21, 0
      %p84 = por %p82, %p83
      %p85 = scmp.ne.s32.totalorder %s73, %s74
      %p86 = scmp.eq.s32.totalorder %s22, 1
      %p87 = por %p85, %p86
      %p89 = scmp.ne.s32.totalorder %s74, %s88
      %p90 = scmp.eq.s32.totalorder %s22, 0
      %p91 = por %p89, %p90
      %s93 = sadd.s32 %s92, 1
      %p96 = scmp.eq.s32.totalorder %s16, 1
      %p97 = scmp.ne.s32.totalorder %s92, %s94
      %p98 = scmp.eq.s32.totalorder %s16, 0
      %p99 = por %p97, %p98
      %p100 = scmp.ne.s32.totalorder %s92, %s94
      %p101 = scmp.eq.s32.totalorder %s21, 1
      %p102 = por %p100, %p101
      %p103 = scmp.ne.s32.totalorder %s94, %s95
      %p104 = scmp.eq.s32.totalorder %s21, 0
      %p105 = por %p103, %p104
      %p106 = scmp.ne.s32.totalorder %s94, %s95
      %p107 = scmp.eq.s32.totalorder %s22, 1
      %p108 = por %p106, %p107
      %p110 = scmp.ne.s32.totalorder %s95, %s109
      %p111 = scmp.eq.s32.totalorder %s22, 0
      %p112 = por %p110, %p111
      %s114 = sadd.s32 %s113, 1
      %p117 = scmp.eq.s32.totalorder %s16, 1
      %p118 = scmp.ne.s32.totalorder %s113, %s115
      %p119 = scmp.eq.s32.totalorder %s16, 0
      %p120 = por %p118, %p119
      %p121 = scmp.ne.s32.totalorder %s113, %s115
      %p122 = scmp.eq.s32.totalorder %s21, 1
      %p123 = por %p121, %p122
      %p124 = scmp.ne.s32.totalorder %s115, %s116
      %p125 = scmp.eq.s32.totalorder %s21, 0
      %p126 = por %p124, %p125
      %p127 = scmp.ne.s32.totalorder %s115, %s116
      %p128 = scmp.eq.s32.totalorder %s22, 1
      %p129 = por %p127, %p128
      %p131 = scmp.ne.s32.totalorder %s116, %s130
      %p132 = scmp.eq.s32.totalorder %s22, 0
      %p133 = por %p131, %p132
      %s135 = sadd.s32 %s134, 1
      %p138 = scmp.eq.s32.totalorder %s16, 1
      %p139 = scmp.ne.s32.totalorder %s134, %s136
      %p140 = scmp.eq.s32.totalorder %s16, 0
      %p141 = por %p139, %p140
      %p142 = scmp.ne.s32.totalorder %s134, %s136
      %p143 = scmp.eq.s32.totalorder %s21, 1
      %p144 = por %p142, %p143
      %p145 = scmp.ne.s32.totalorder %s136, %s137
      %p146 = scmp.eq.s32.totalorder %s21, 0
      %p147 = por %p145, %p146
      %p148 = scmp.ne.s32.totalorder %s136, %s137
      %p149 = scmp.eq.s32.totalorder %s22, 1
      %p150 = por %p148, %p149
      %p152 = scmp.ne.s32.totalorder %s137, %s151
      %p153 = scmp.eq.s32.totalorder %s22, 0
      %p154 = por %p152, %p153
      %s156 = sadd.s32 %s155, 1
      %p159 = scmp.eq.s32.totalorder %s16, 1
      %p160 = scmp.ne.s32.totalorder %s155, %s157
      %p161 = scmp.eq.s32.totalorder %s16, 0
      %p162 = por %p160, %p161
      %p163 = scmp.ne.s32.totalorder %s155, %s157
      %p164 = scmp.eq.s32.totalorder %s21, 1
      %p165 = por %p163, %p164
      %p166 = scmp.ne.s32.totalorder %s157, %s158
      %p167 = scmp.eq.s32.totalorder %s21, 0
      %p168 = por %p166, %p167
      %p169 = scmp.ne.s32.totalorder %s157, %s158
      %p170 = scmp.eq.s32.totalorder %s22, 1
      %p171 = por %p169, %p170
      %p173 = scmp.ne.s32.totalorder %s158, %s172
      %p174 = scmp.eq.s32.totalorder %s22, 0
      %p175 = por %p173, %p174
      %s176 = ssub.s32 %s16, %s23
      %p177 = scmp.eq.s32.totalorder %s176, 0
      %s179 = sadd.s32 %s178, 1
      %s180 = scalar_select %p177, %s178, %s179
      %p183 = pneg %p177
      %p184 = scmp.eq.s32.totalorder %s16, 1
      %p185 = por %p183, %p184
      %p186 = scmp.ne.s32.totalorder %s178, %s181
      %p187 = scmp.eq.s32.totalorder %s16, 0
      %p188 = por %p186, %p187
      %p189 = scmp.ne.s32.totalorder %s178, %s181
      %p190 = scmp.eq.s32.totalorder %s21, 1
      %p191 = por %p189, %p190
      %p192 = scmp.ne.s32.totalorder %s181, %s182
      %p193 = scmp.eq.s32.totalorder %s21, 0
      %p194 = por %p192, %p193
      %p195 = scmp.ne.s32.totalorder %s181, %s182
      %p196 = scmp.eq.s32.totalorder %s22, 1
      %p197 = por %p195, %p196
      %p199 = scmp.ne.s32.totalorder %s182, %s198
      %p200 = scmp.eq.s32.totalorder %s22, 0
      %p201 = por %p199, %p200
      %p202 = scmp.le.s32.totalorder 1, %s16
      %p203 = scmp.lt.s32.totalorder %s16, 3
      %p204 = pnand %p202, %p203
      %p205 = pneg %p204
      // Predicated region
      $region9: #{attention_pool_forward.1} parent=5 // pred_check
        _
      $region10: #{attention_pool_forward.1} parent=5 // pred_check_branch
        %207 = sbr.rel (%p204) target = $region12
      $region11: #{attention_pool_forward.1} parent=5 // pred_region
        %s208 = ssub.s32 %s16, 1
        // Predicated region
        $region13: #{attention_pool_forward.1} parent=11 // pred_check
          %p209 = pneg %p63
        $region14: #{attention_pool_forward.1} parent=11 // pred_check_branch
          %211 = sbr.rel (%p209) target = $region16
        $region15: #{attention_pool_forward.1} parent=11 // pred_region
          _
        $region16: #{attention_pool_forward.1} parent=11 // pred_fallthru
          _
        // Predicated region
        $region17: #{attention_pool_forward.1} parent=11 // pred_check
          %p212 = pneg %p84
        $region18: #{attention_pool_forward.1} parent=11 // pred_check_branch
          %214 = sbr.rel (%p212) target = $region20
        $region19: #{attention_pool_forward.1} parent=11 // pred_region
          _
        $region20: #{attention_pool_forward.1} parent=11 // pred_fallthru
          _
        // Predicated region
        $region21: #{attention_pool_forward.1} parent=11 // pred_check
          %p215 = pneg %p105
        $region22: #{attention_pool_forward.1} parent=11 // pred_check_branch
          %217 = sbr.rel (%p215) target = $region24
        $region23: #{attention_pool_forward.1} parent=11 // pred_region
          _
        $region24: #{attention_pool_forward.1} parent=11 // pred_fallthru
          _
        // Predicated region
        $region25: #{attention_pool_forward.1} parent=11 // pred_check
          %p218 = pneg %p126
        $region26: #{attention_pool_forward.1} parent=11 // pred_check_branch
          %220 = sbr.rel (%p218) target = $region28
        $region27: #{attention_pool_forward.1} parent=11 // pred_region
          _
        $region28: #{attention_pool_forward.1} parent=11 // pred_fallthru
          _
        // Predicated region
        $region29: #{attention_pool_forward.1} parent=11 // pred_check
          %p221 = pneg %p147
        $region30: #{attention_pool_forward.1} parent=11 // pred_check_branch
          %223 = sbr.rel (%p221) target = $region32
        $region31: #{attention_pool_forward.1} parent=11 // pred_region
          _
        $region32: #{attention_pool_forward.1} parent=11 // pred_fallthru
          _
        // Predicated region
        $region33: #{attention_pool_forward.1} parent=11 // pred_check
          %p224 = pneg %p168
        $region34: #{attention_pool_forward.1} parent=11 // pred_check_branch
          %226 = sbr.rel (%p224) target = $region36
        $region35: #{attention_pool_forward.1} parent=11 // pred_region
          _
        $region36: #{attention_pool_forward.1} parent=11 // pred_fallthru
          _
      $region12: #{attention_pool_forward.1} parent=5 // pred_fallthru
        _
      %p227 = scmp.lt.s32.totalorder %s16, 2
      // Predicated region
      $region37: #{attention_pool_forward.1} parent=5 // pred_check
        %p228 = pneg %p227
      $region38: #{attention_pool_forward.1} parent=5 // pred_check_branch
        %230 = sbr.rel (%p228) target = $region40
      $region39: #{attention_pool_forward.1} parent=5 // pred_region
        // Predicated region
        $region41: #{attention_pool_forward.1} parent=39 // pred_check
          %p231 = pneg %p36
        $region42: #{attention_pool_forward.1} parent=39 // pred_check_branch
          %233 = sbr.rel (%p231) target = $region44
        $region43: #{attention_pool_forward.1} parent=39 // pred_region
          %p234 = scmp.lt.s32.totalorder %s16, 1
          %s235 = scalar_select %p234, %s16, 1
          %s236 = smul.addr %s235, 9
          %s237 = smul.addr %s236, 4
          %s238 = scalar_lea.vmem %s0, %s237
        $region44: #{attention_pool_forward.1} parent=39 // pred_fallthru
          _
      $region40: #{attention_pool_forward.1} parent=5 // pred_fallthru
        _
      %p239 = scmp.le.s32.totalorder 1, %s16
      %p240 = scmp.lt.s32.totalorder %s16, 3
      %p241 = pnand %p239, %p240
      %p242 = pneg %p241
      // Predicated region
      $region45: #{attention_pool_forward.1} parent=5 // pred_check
        _
      $region46: #{attention_pool_forward.1} parent=5 // pred_check_branch
        %244 = sbr.rel (%p241) target = $region48
      $region47: #{attention_pool_forward.1} parent=5 // pred_region
        %s245 = ssub.s32 %s16, 1
        %p246 = scmp.lt.s32.totalorder %s21, 1
        %s247 = scalar_select %p246, %s21, 1
        %s248 = smul.addr %s247, 9
        %s249 = smul.addr %s248, 4
        %s250 = scalar_lea.vmem %s0, %s249
        %p251 = pneg %p42
        %p252 = pneg %p39
        %p253 = pneg %p63
        %p254 = pneg %p60
        %p255 = pneg %p84
        %p256 = pneg %p81
        %p257 = pneg %p105
        %p258 = pneg %p102
        %p259 = pneg %p126
        %p260 = pneg %p123
        %p261 = pneg %p147
        %p262 = pneg %p144
        %p263 = pneg %p168
        %p264 = pneg %p165
        %p265 = pneg %p194
        %p266 = pneg %p191
        %s267 = sand.u32 %s181, 1
        %s268 = scalar_lea.sflag [#allocation3], %s267
        %s269 = sand.u32 %s181, 1
        %s270 = scalar_lea.vmem [#allocation2], %s269
        %p271 = scmp.lt.s32.totalorder %s21, 1
        %s272 = scalar_select %p271, %s21, 1
        %s273 = smul.addr %s272, 9
        %s274 = smul.addr %s273, 4
        %s275 = scalar_lea.vmem %s0, %s274
        %v277 = vld [vmem:[%s275] sm:$0xf]
        %v278 = vld [vmem:[%s275 + $0x4] sm:$0xf]
        %v279 = vld [vmem:[%s275 + $0x8] sm:$0xf]
        %v280 = vld [vmem:[%s275 + $0xc] sm:$0xf]
        %v281 = vld [vmem:[%s275 + $0x10] sm:$0xf]
        %v282 = vld [vmem:[%s275 + $0x14] sm:$0xf]
        %v283 = vld [vmem:[%s275 + $0x18] sm:$0xf]
        %v284 = vld [vmem:[%s275 + $0x1c] sm:$0xf]
        %v285 = vld [vmem:[%s275 + $0x20] sm:$0x1]
        %v286 = vld [vmem:[%s1] sm:$0xf]
        %v287 = vld [vmem:[%s1 + $0x4] sm:$0xf]
        %v288 = vld [vmem:[%s1 + $0x8] sm:$0xf]
        %v289 = vld [vmem:[%s1 + $0xc] sm:$0xf]
        %v290 = vld [vmem:[%s1 + $0x10] sm:$0xf]
        %v291 = vld [vmem:[%s1 + $0x14] sm:$0xf]
        %v292 = vld [vmem:[%s1 + $0x18] sm:$0xf]
        %v293 = vld [vmem:[%s1 + $0x1c] sm:$0xf]
        %v294 = vld [vmem:[%s2] sm:$0x1]
        %v296 = vlaneseq
        %v297 = vshrl.u32 %v296, 7
        %v298 = vsub.s32 0, %v297
        %v299 = vrot.slane %v294, %v298
        %v310 = vunpack.c.l.b16 %v277
        %v311 = vunpack.c.l.b16 %v278
        %v312 = vunpack.c.l.b16 %v279
        %v313 = vunpack.c.l.b16 %v280
        %v314 = vunpack.c.l.b16 %v281
        %v315 = vunpack.c.l.b16 %v282
        %v316 = vunpack.c.l.b16 %v283
        %v317 = vunpack.c.l.b16 %v284
        %v318 = vunpack.c.l.b16 %v285
        %v319 = vpack.c.b16 %v311, %v310
        %v320 = vpack.c.b16 %v313, %v312
        %v321 = vpack.c.b16 %v315, %v314
        %v322 = vpack.c.b16 %v317, %v316
        %v323 = vpack.c.b16 %v318, %v318
        %v332 = vunpack.c.l.b16 %v286
        %v333 = vunpack.c.l.b16 %v287
        %v334 = vunpack.c.l.b16 %v288
        %v335 = vunpack.c.l.b16 %v289
        %v336 = vunpack.c.l.b16 %v290
        %v337 = vunpack.c.l.b16 %v291
        %v338 = vunpack.c.l.b16 %v292
        %v339 = vunpack.c.l.b16 %v293
        %v340 = vpack.c.b16 %v333, %v332
        %v341 = vpack.c.b16 %v335, %v334
        %v342 = vpack.c.b16 %v337, %v336
        %v343 = vpack.c.b16 %v339, %v338
        %vm348 = vcmask 523264
        %v350 = vsel %vm348, %v319, 0
        %v353 = vsel %vm348, %v320, 0
        %v356 = vsel %vm348, %v321, 0
        %v359 = vsel %vm348, %v322, 0
        %v362 = vsel %vm348, %v323, 0
        %364 = vmatprep.subr.bf16.mxu0 0
        %365 = vmatpush1.bf16.msra.mxu0 0
        %366 = vmatprep.subr.bf16.mxu0 0
        %367 = vmatpush1.bf16.msra.mxu0 0
        %368 = vmatprep.subr.bf16.mxu0 0
        %369 = vmatpush1.bf16.msra.mxu0 0
        %370 = vmatprep.subr.bf16.mxu0 0
        %371 = vmatpush1.bf16.msra.mxu0 0
        %372 = vmatprep.subr.bf16.mxu0 0
        %373 = vmatpush1.bf16.msra.mxu0 %v343
        %374 = vmatprep.subr.bf16.mxu0 0
        %375 = vmatpush1.bf16.msra.mxu0 %v342
        %376 = vmatprep.subr.bf16.mxu0 0
        %377 = vmatpush1.bf16.msra.mxu0 %v341
        %378 = vmatprep.subr.bf16.mxu0 0
        %379 = vmatpush1.bf16.msra.mxu0 %v340
        %380 = vmatprep.subr.bf16.mxu0 0
        %381 = vmatpush2.bf16.msra.mxu0 0
        %382 = vmatprep.subr.bf16.mxu0 0
        %383 = vmatpush2.bf16.msra.mxu0 0
        %384 = vmatprep.subr.bf16.mxu0 0
        %385 = vmatpush2.bf16.msra.mxu0 0
        %386 = vmatprep.subr.bf16.mxu0 0
        %387 = vmatpush2.bf16.msra.mxu0 0
        %388 = vmatprep.subr.bf16.mxu0 0
        %389 = vmatpush2.bf16.msra.mxu0 0
        %390 = vmatprep.subr.bf16.mxu0 0
        %391 = vmatpush2.bf16.msra.mxu0 0
        %392 = vmatprep.subr.bf16.mxu0 0
        %393 = vmatpush2.bf16.msra.mxu0 0
        %394 = vmatprep.subr.bf16.mxu0 0
        %395 = vmatpush2.bf16.msra.mxu0 0
        %396 = vmatprep.mubr.bf16.mxu0 0
        %397 = vmatmul.mubr.bf16.gmra.mxu0 %v350
        %v398 = vpop.f32.mrf.mxu0
        %v399 = vadd.f32 %v299, %v398
        %v400 = vpop.f32.mrf.mxu0
        %v401 = vpop.f32.mrf.mxu0
        %v402 = vadd.f32 %v299, %v401
        %v403 = vpop.f32.mrf.mxu0
        %404 = vmatprep.mubr.bf16.mxu0 0
        %405 = vmatmul.mubr.bf16.gmra.mxu0 %v353
        %v406 = vpop.f32.mrf.mxu0
        %v407 = vadd.f32 %v299, %v406
        %v408 = vpop.f32.mrf.mxu0
        %v409 = vpop.f32.mrf.mxu0
        %v410 = vadd.f32 %v299, %v409
        %v411 = vpop.f32.mrf.mxu0
        %412 = vmatprep.mubr.bf16.mxu0 0
        %413 = vmatmul.mubr.bf16.gmra.mxu0 %v356
        %v414 = vpop.f32.mrf.mxu0
        %v415 = vadd.f32 %v299, %v414
        %v416 = vpop.f32.mrf.mxu0
        %v417 = vpop.f32.mrf.mxu0
        %v418 = vadd.f32 %v299, %v417
        %v419 = vpop.f32.mrf.mxu0
        %420 = vmatprep.mubr.bf16.mxu0 0
        %421 = vmatmul.mubr.bf16.gmra.mxu0 %v359
        %v422 = vpop.f32.mrf.mxu0
        %v423 = vadd.f32 %v299, %v422
        %v424 = vpop.f32.mrf.mxu0
        %v425 = vpop.f32.mrf.mxu0
        %v426 = vadd.f32 %v299, %v425
        %v427 = vpop.f32.mrf.mxu0
        %428 = vmatprep.mubr.bf16.mxu0 0
        %429 = vmatmul.mubr.bf16.gmra.mxu0 %v362
        %v430 = vpop.f32.mrf.mxu0
        %v431 = vadd.f32 %v299, %v430
        %v432 = vpop.f32.mrf.mxu0
        %v433 = vpop.f32.mrf.mxu0
        %v434 = vpop.f32.mrf.mxu0
        %435 = vdwg.mxu0
        %v436 = vld [vmem:[%s3] sm:$0xf]
        %v437 = vld [vmem:[%s3 + $0x4] sm:$0xf]
        %v438 = vld [vmem:[%s3 + $0x8] sm:$0xf]
        %v439 = vld [vmem:[%s3 + $0xc] sm:$0xf]
        %v440 = vld [vmem:[%s3 + $0x10] sm:$0xf]
        %v441 = vld [vmem:[%s3 + $0x14] sm:$0xf]
        %v442 = vld [vmem:[%s3 + $0x18] sm:$0xf]
        %v443 = vld [vmem:[%s3 + $0x1c] sm:$0xf]
        %v444 = vld [vmem:[%s4] sm:$0x1]
        %v453 = vunpack.c.l.b16 %v436
        %v454 = vunpack.c.l.b16 %v437
        %v455 = vunpack.c.l.b16 %v438
        %v456 = vunpack.c.l.b16 %v439
        %v457 = vunpack.c.l.b16 %v440
        %v458 = vunpack.c.l.b16 %v441
        %v459 = vunpack.c.l.b16 %v442
        %v460 = vunpack.c.l.b16 %v443
        %v461 = vpack.c.b16 %v454, %v453
        %v462 = vpack.c.b16 %v456, %v455
        %v463 = vpack.c.b16 %v458, %v457
        %v464 = vpack.c.b16 %v460, %v459
        %v470 = vsel %vm348, %v277, 0
        %472 = vmatprep.subr.bf16.mxu0 0
        %473 = vmatpush1.bf16.msra.mxu0 0
        %474 = vmatprep.subr.bf16.mxu0 0
        %475 = vmatpush1.bf16.msra.mxu0 0
        %476 = vmatprep.subr.bf16.mxu0 0
        %477 = vmatpush1.bf16.msra.mxu0 0
        %478 = vmatprep.subr.bf16.mxu0 0
        %479 = vmatpush1.bf16.msra.mxu0 0
        %480 = vmatprep.subr.bf16.mxu0 0
        %481 = vmatpush1.bf16.msra.mxu0 %v464
        %482 = vmatprep.subr.bf16.mxu0 0
        %483 = vmatpush1.bf16.msra.mxu0 %v463
        %484 = vmatprep.subr.bf16.mxu0 0
        %485 = vmatpush1.bf16.msra.mxu0 %v462
        %486 = vmatprep.subr.bf16.mxu0 0
        %487 = vmatpush1.bf16.msra.mxu0 %v461
        %488 = vmatprep.subr.bf16.mxu0 0
        %489 = vmatpush2.bf16.msra.mxu0 0
        %490 = vmatprep.subr.bf16.mxu0 0
        %491 = vmatpush2.bf16.msra.mxu0 0
        %492 = vmatprep.subr.bf16.mxu0 0
        %493 = vmatpush2.bf16.msra.mxu0 0
        %494 = vmatprep.subr.bf16.mxu0 0
        %495 = vmatpush2.bf16.msra.mxu0 0
        %496 = vmatprep.subr.bf16.mxu0 0
        %497 = vmatpush2.bf16.msra.mxu0 0
        %498 = vmatprep.subr.bf16.mxu0 0
        %499 = vmatpush2.bf16.msra.mxu0 0
        %500 = vmatprep.subr.bf16.mxu0 0
        %501 = vmatpush2.bf16.msra.mxu0 0
        %502 = vmatprep.subr.bf16.mxu0 0
        %503 = vmatpush2.bf16.msra.mxu0 0
        %504 = vmatprep.mubr.bf16.mxu0 0
        %505 = vmatmul.mubr.bf16.gmra.mxu0 %v470
        %v506 = vpop.f32.mrf.mxu0
        %v507 = vadd.f32 %v444, %v506
        %v508 = vpop.f32.mrf.mxu0
        %v509 = vpop.f32.mrf.mxu0
        %v510 = vpop.f32.mrf.mxu0
        %511 = vdwg.mxu0
        %v512 = vmul.f32 %v507, 0.25
        %v513 = vpack.c.bf16 %v512, %v512
        %v514 = vpack.c.bf16 %v402, %v399
        %v515 = vpack.c.bf16 %v410, %v407
        %v516 = vpack.c.bf16 %v418, %v415
        %v517 = vpack.c.bf16 %v426, %v423
        %v518 = vpack.c.bf16 %v431, %v431
        %vm519 = vcmask 130048
        %v521 = vsel %vm519, %v513, 0
        %v524 = vsel %vm519, %v514, 0
        %v527 = vsel %vm519, %v515, 0
        %v530 = vsel %vm519, %v516, 0
        %v533 = vsel %vm519, %v517, 0
        %v536 = vsel %vm519, %v518, 0
        %538 = vmatprep.subr.bf16.mxu0 0
        %539 = vmatpush1.bf16.xpose.msra.mxu0 0
        %540 = vmatprep.subr.bf16.mxu0 0
        %541 = vmatpush1.bf16.xpose.msra.mxu0 0
        %542 = vmatprep.subr.bf16.mxu0 0
        %543 = vmatpush1.bf16.xpose.msra.mxu0 0
        %544 = vmatprep.subr.bf16.mxu0 0
        %545 = vmatpush1.bf16.xpose.msra.mxu0 %v536
        %546 = vmatprep.subr.bf16.mxu0 0
        %547 = vmatpush1.bf16.xpose.msra.mxu0 %v533
        %548 = vmatprep.subr.bf16.mxu0 0
        %549 = vmatpush1.bf16.xpose.msra.mxu0 %v530
        %550 = vmatprep.subr.bf16.mxu0 0
        %551 = vmatpush1.bf16.xpose.msra.mxu0 %v527
        %552 = vmatprep.subr.bf16.mxu0 0
        %553 = vmatpush1.bf16.xpose.msra.mxu0 %v524
        %554 = vmatprep.subr.bf16.mxu0 0
        %555 = vmatpush2.bf16.xpose.msra.mxu0 0
        %556 = vmatprep.subr.bf16.mxu0 0
        %557 = vmatpush2.bf16.xpose.msra.mxu0 0
        %558 = vmatprep.subr.bf16.mxu0 0
        %559 = vmatpush2.bf16.xpose.msra.mxu0 0
        %560 = vmatprep.subr.bf16.mxu0 0
        %561 = vmatpush2.bf16.xpose.msra.mxu0 0
        %562 = vmatprep.subr.bf16.mxu0 0
        %563 = vmatpush2.bf16.xpose.msra.mxu0 0
        %564 = vmatprep.subr.bf16.mxu0 0
        %565 = vmatpush2.bf16.xpose.msra.mxu0 0
        %566 = vmatprep.subr.bf16.mxu0 0
        %567 = vmatpush2.bf16.xpose.msra.mxu0 0
        %568 = vmatprep.subr.bf16.mxu0 0
        %569 = vmatpush2.bf16.xpose.msra.mxu0 0
        %570 = vmatprep.mubr.bf16.mxu0 0
        %571 = vmatmul.mubr.bf16.gmra.mxu0 %v521
        %v572 = vpop.f32.mrf.mxu0
        %v573 = vadd.f32 0.0, %v572
        %v574 = vpop.f32.mrf.mxu0
        %v575 = vpop.f32.mrf.mxu0
        %v576 = vpop.f32.mrf.mxu0
        %577 = vdwg.mxu0
        %vm578 = vcmask 524288
        %v579 = vsel %vm578, %v573, -inf
        %580 = vmax.xlane.f32.xlu0 %v579
        %v581 = vpop.xlane.xlu0 %580
        %v582 = vsub.f32 %v573, %v581
        %v583 = vmul.f32 %v582, 1.442695
        %v584 = vpow.pop %v583
        %v585 = vsel %vm578, %v584, 0.0
        %586 = vadd.xlane.f32.xlu0 %v585
        %v587 = vpop.xlane.xlu0 %586
        %v588 = vrcp.pop %v587
        %v589 = vmul.f32 %v584, %v588
        %v590 = vpack.c.bf16 %v589, %v589
        %596 = vrot.lane.b32.xlu0 %v514, 64
        %v597 = vpop.permute.xlu0 %596
        %598 = vrot.lane.b32.xlu0 %v515, 64
        %v599 = vpop.permute.xlu0 %598
        %600 = vrot.lane.b32.xlu0 %v516, 64
        %v601 = vpop.permute.xlu0 %600
        %602 = vrot.lane.b32.xlu0 %v517, 64
        %v603 = vpop.permute.xlu0 %602
        %604 = vrot.lane.b32.xlu0 %v518, 64
        %v605 = vpop.permute.xlu0 %604
        %vm610 = vcmask 531456
        %v612 = vsel %vm610, %v590, 0
        %vm614 = vcmask 1040384
        %v615 = vsel 0, 4294967295, 65535
        %v616 = vsel %vm614, %v615, 0
        %v618 = vand.u32 %v605, %v616
        %620 = vmatprep.subr.bf16.mxu0 0
        %621 = vmatpush1.bf16.msra.mxu0 0
        %622 = vmatprep.subr.bf16.mxu0 0
        %623 = vmatpush1.bf16.msra.mxu0 0
        %624 = vmatprep.subr.bf16.mxu0 0
        %625 = vmatpush1.bf16.msra.mxu0 0
        %626 = vmatprep.subr.bf16.mxu0 0
        %627 = vmatpush1.bf16.msra.mxu0 %v618
        %628 = vmatprep.subr.bf16.mxu0 0
        %629 = vmatpush1.bf16.msra.mxu0 %v603
        %630 = vmatprep.subr.bf16.mxu0 0
        %631 = vmatpush1.bf16.msra.mxu0 %v601
        %632 = vmatprep.subr.bf16.mxu0 0
        %633 = vmatpush1.bf16.msra.mxu0 %v599
        %634 = vmatprep.subr.bf16.mxu0 0
        %635 = vmatpush1.bf16.msra.mxu0 %v597
        %636 = vmatprep.subr.bf16.mxu0 0
        %637 = vmatpush2.bf16.msra.mxu0 0
        %638 = vmatprep.subr.bf16.mxu0 0
        %639 = vmatpush2.bf16.msra.mxu0 0
        %640 = vmatprep.subr.bf16.mxu0 0
        %641 = vmatpush2.bf16.msra.mxu0 0
        %642 = vmatprep.subr.bf16.mxu0 0
        %643 = vmatpush2.bf16.msra.mxu0 0
        %644 = vmatprep.subr.bf16.mxu0 0
        %645 = vmatpush2.bf16.msra.mxu0 0
        %646 = vmatprep.subr.bf16.mxu0 0
        %647 = vmatpush2.bf16.msra.mxu0 0
        %648 = vmatprep.subr.bf16.mxu0 0
        %649 = vmatpush2.bf16.msra.mxu0 0
        %650 = vmatprep.subr.bf16.mxu0 0
        %651 = vmatpush2.bf16.msra.mxu0 0
        %652 = vmatprep.mubr.bf16.mxu0 0
        %653 = vmatmul.mubr.bf16.gmra.mxu0 %v612
        %v654 = vpop.f32.mrf.mxu0
        %v655 = vadd.f32 0.0, %v654
        %v656 = vpop.f32.mrf.mxu0
        %v657 = vpop.f32.mrf.mxu0
        %v658 = vpop.f32.mrf.mxu0
        %659 = vdwg.mxu0
        %661 = vrot.lane.b32.xlu0 %v513, 112
        %v662 = vpop.permute.xlu0 %661
        %663 = vrot.lane.b32.xlu0 %v514, 112
        %v664 = vpop.permute.xlu0 %663
        %665 = vrot.lane.b32.xlu0 %v515, 112
        %v666 = vpop.permute.xlu0 %665
        %667 = vrot.lane.b32.xlu0 %v516, 112
        %v668 = vpop.permute.xlu0 %667
        %669 = vrot.lane.b32.xlu0 %v517, 112
        %v670 = vpop.permute.xlu0 %669
        %671 = vrot.lane.b32.xlu0 %v518, 112
        %v672 = vpop.permute.xlu0 %671
        %v674 = vsel %vm519, %v662, 0
        %v677 = vsel %vm519, %v664, 0
        %v680 = vsel %vm519, %v666, 0
        %v683 = vsel %vm519, %v668, 0
        %v686 = vsel %vm519, %v670, 0
        %v689 = vsel %vm519, %v672, 0
        %691 = vmatprep.subr.bf16.mxu0 0
        %692 = vmatpush1.bf16.xpose.msra.mxu0 0
        %693 = vmatprep.subr.bf16.mxu0 0
        %694 = vmatpush1.bf16.xpose.msra.mxu0 0
        %695 = vmatprep.subr.bf16.mxu0 0
        %696 = vmatpush1.bf16.xpose.msra.mxu0 0
        %697 = vmatprep.subr.bf16.mxu0 0
        %698 = vmatpush1.bf16.xpose.msra.mxu0 %v689
        %699 = vmatprep.subr.bf16.mxu0 0
        %700 = vmatpush1.bf16.xpose.msra.mxu0 %v686
        %701 = vmatprep.subr.bf16.mxu0 0
        %702 = vmatpush1.bf16.xpose.msra.mxu0 %v683
        %703 = vmatprep.subr.bf16.mxu0 0
        %704 = vmatpush1.bf16.xpose.msra.mxu0 %v680
        %705 = vmatprep.subr.bf16.mxu0 0
        %706 = vmatpush1.bf16.xpose.msra.mxu0 %v677
        %707 = vmatprep.subr.bf16.mxu0 0
        %708 = vmatpush2.bf16.xpose.msra.mxu0 0
        %709 = vmatprep.subr.bf16.mxu0 0
        %710 = vmatpush2.bf16.xpose.msra.mxu0 0
        %711 = vmatprep.subr.bf16.mxu0 0
        %712 = vmatpush2.bf16.xpose.msra.mxu0 0
        %713 = vmatprep.subr.bf16.mxu0 0
        %714 = vmatpush2.bf16.xpose.msra.mxu0 0
        %715 = vmatprep.subr.bf16.mxu0 0
        %716 = vmatpush2.bf16.xpose.msra.mxu0 0
        %717 = vmatprep.subr.bf16.mxu0 0
        %718 = vmatpush2.bf16.xpose.msra.mxu0 0
        %719 = vmatprep.subr.bf16.mxu0 0
        %720 = vmatpush2.bf16.xpose.msra.mxu0 0
        %721 = vmatprep.subr.bf16.mxu0 0
        %722 = vmatpush2.bf16.xpose.msra.mxu0 0
        %723 = vmatprep.mubr.bf16.mxu0 0
        %724 = vmatmul.mubr.bf16.gmra.mxu0 %v674
        %v725 = vpop.f32.mrf.mxu0
        %v726 = vadd.f32 0.0, %v725
        %v727 = vpop.f32.mrf.mxu0
        %v728 = vpop.f32.mrf.mxu0
        %v729 = vpop.f32.mrf.mxu0
        %730 = vdwg.mxu0
        %v731 = vsel %vm578, %v726, -inf
        %732 = vmax.xlane.f32.xlu0 %v731
        %v733 = vpop.xlane.xlu0 %732
        %v734 = vsub.f32 %v726, %v733
        %v735 = vmul.f32 %v734, 1.442695
        %v736 = vpow.pop %v735
        %v737 = vsel %vm578, %v736, 0.0
        %738 = vadd.xlane.f32.xlu0 %v737
        %v739 = vpop.xlane.xlu0 %738
        %v740 = vrcp.pop %v739
        %v741 = vmul.f32 %v736, %v740
        %v742 = vpack.c.bf16 %v741, %v741
        %743 = vrot.lane.b32.xlu0 %v514, 48
        %v744 = vpop.permute.xlu0 %743
        %745 = vrot.lane.b32.xlu0 %v515, 48
        %v746 = vpop.permute.xlu0 %745
        %747 = vrot.lane.b32.xlu0 %v516, 48
        %v748 = vpop.permute.xlu0 %747
        %749 = vrot.lane.b32.xlu0 %v517, 48
        %v750 = vpop.permute.xlu0 %749
        %751 = vrot.lane.b32.xlu0 %v518, 48
        %v752 = vpop.permute.xlu0 %751
        %v758 = vsel %vm610, %v742, 0
        %v761 = vand.u32 %v752, %v616
        %763 = vmatprep.subr.bf16.mxu0 0
        %764 = vmatpush1.bf16.msra.mxu0 0
        %765 = vmatprep.subr.bf16.mxu0 0
        %766 = vmatpush1.bf16.msra.mxu0 0
        %767 = vmatprep.subr.bf16.mxu0 0
        %768 = vmatpush1.bf16.msra.mxu0 0
        %769 = vmatprep.subr.bf16.mxu0 0
        %770 = vmatpush1.bf16.msra.mxu0 %v761
        %771 = vmatprep.subr.bf16.mxu0 0
        %772 = vmatpush1.bf16.msra.mxu0 %v750
        %773 = vmatprep.subr.bf16.mxu0 0
        %774 = vmatpush1.bf16.msra.mxu0 %v748
        %775 = vmatprep.subr.bf16.mxu0 0
        %776 = vmatpush1.bf16.msra.mxu0 %v746
        %777 = vmatprep.subr.bf16.mxu0 0
        %778 = vmatpush1.bf16.msra.mxu0 %v744
        %779 = vmatprep.subr.bf16.mxu0 0
        %780 = vmatpush2.bf16.msra.mxu0 0
        %781 = vmatprep.subr.bf16.mxu0 0
        %782 = vmatpush2.bf16.msra.mxu0 0
        %783 = vmatprep.subr.bf16.mxu0 0
        %784 = vmatpush2.bf16.msra.mxu0 0
        %785 = vmatprep.subr.bf16.mxu0 0
        %786 = vmatpush2.bf16.msra.mxu0 0
        %787 = vmatprep.subr.bf16.mxu0 0
        %788 = vmatpush2.bf16.msra.mxu0 0
        %789 = vmatprep.subr.bf16.mxu0 0
        %790 = vmatpush2.bf16.msra.mxu0 0
        %791 = vmatprep.subr.bf16.mxu0 0
        %792 = vmatpush2.bf16.msra.mxu0 0
        %793 = vmatprep.subr.bf16.mxu0 0
        %794 = vmatpush2.bf16.msra.mxu0 0
        %795 = vmatprep.mubr.bf16.mxu0 0
        %796 = vmatmul.mubr.bf16.gmra.mxu0 %v758
        %v797 = vpop.f32.mrf.mxu0
        %v798 = vadd.f32 0.0, %v797
        %v799 = vpop.f32.mrf.mxu0
        %v800 = vpop.f32.mrf.mxu0
        %v801 = vpop.f32.mrf.mxu0
        %802 = vdwg.mxu0
        %803 = vrot.lane.b32.xlu0 %v513, 96
        %v804 = vpop.permute.xlu0 %803
        %805 = vrot.lane.b32.xlu0 %v514, 96
        %v806 = vpop.permute.xlu0 %805
        %807 = vrot.lane.b32.xlu0 %v515, 96
        %v808 = vpop.permute.xlu0 %807
        %809 = vrot.lane.b32.xlu0 %v516, 96
        %v810 = vpop.permute.xlu0 %809
        %811 = vrot.lane.b32.xlu0 %v517, 96
        %v812 = vpop.permute.xlu0 %811
        %813 = vrot.lane.b32.xlu0 %v518, 96
        %v814 = vpop.permute.xlu0 %813
        %v816 = vsel %vm519, %v804, 0
        %v819 = vsel %vm519, %v806, 0
        %v822 = vsel %vm519, %v808, 0
        %v825 = vsel %vm519, %v810, 0
        %v828 = vsel %vm519, %v812, 0
        %v831 = vsel %vm519, %v814, 0
        %833 = vmatprep.subr.bf16.mxu0 0
        %834 = vmatpush1.bf16.xpose.msra.mxu0 0
        %835 = vmatprep.subr.bf16.mxu0 0
        %836 = vmatpush1.bf16.xpose.msra.mxu0 0
        %837 = vmatprep.subr.bf16.mxu0 0
        %838 = vmatpush1.bf16.xpose.msra.mxu0 0
        %839 = vmatprep.subr.bf16.mxu0 0
        %840 = vmatpush1.bf16.xpose.msra.mxu0 %v831
        %841 = vmatprep.subr.bf16.mxu0 0
        %842 = vmatpush1.bf16.xpose.msra.mxu0 %v828
        %843 = vmatprep.subr.bf16.mxu0 0
        %844 = vmatpush1.bf16.xpose.msra.mxu0 %v825
        %845 = vmatprep.subr.bf16.mxu0 0
        %846 = vmatpush1.bf16.xpose.msra.mxu0 %v822
        %847 = vmatprep.subr.bf16.mxu0 0
        %848 = vmatpush1.bf16.xpose.msra.mxu0 %v819
        %849 = vmatprep.subr.bf16.mxu0 0
        %850 = vmatpush2.bf16.xpose.msra.mxu0 0
        %851 = vmatprep.subr.bf16.mxu0 0
        %852 = vmatpush2.bf16.xpose.msra.mxu0 0
        %853 = vmatprep.subr.bf16.mxu0 0
        %854 = vmatpush2.bf16.xpose.msra.mxu0 0
        %855 = vmatprep.subr.bf16.mxu0 0
        %856 = vmatpush2.bf16.xpose.msra.mxu0 0
        %857 = vmatprep.subr.bf16.mxu0 0
        %858 = vmatpush2.bf16.xpose.msra.mxu0 0
        %859 = vmatprep.subr.bf16.mxu0 0
        %860 = vmatpush2.bf16.xpose.msra.mxu0 0
        %861 = vmatprep.subr.bf16.mxu0 0
        %862 = vmatpush2.bf16.xpose.msra.mxu0 0
        %863 = vmatprep.subr.bf16.mxu0 0
        %864 = vmatpush2.bf16.xpose.msra.mxu0 0
        %865 = vmatprep.mubr.bf16.mxu0 0
        %866 = vmatmul.mubr.bf16.gmra.mxu0 %v816
        %v867 = vpop.f32.mrf.mxu0
        %v868 = vadd.f32 0.0, %v867
        %v869 = vpop.f32.mrf.mxu0
        %v870 = vpop.f32.mrf.mxu0
        %v871 = vpop.f32.mrf.mxu0
        %872 = vdwg.mxu0
        %v873 = vsel %vm578, %v868, -inf
        %874 = vmax.xlane.f32.xlu0 %v873
        %v875 = vpop.xlane.xlu0 %874
        %v876 = vsub.f32 %v868, %v875
        %v877 = vmul.f32 %v876, 1.442695
        %v878 = vpow.pop %v877
        %v879 = vsel %vm578, %v878, 0.0
        %880 = vadd.xlane.f32.xlu0 %v879
        %v881 = vpop.xlane.xlu0 %880
        %v882 = vrcp.pop %v881
        %v883 = vmul.f32 %v878, %v882
        %v884 = vpack.c.bf16 %v883, %v883
        %885 = vrot.lane.b32.xlu0 %v514, 32
        %v886 = vpop.permute.xlu0 %885
        %887 = vrot.lane.b32.xlu0 %v515, 32
        %v888 = vpop.permute.xlu0 %887
        %889 = vrot.lane.b32.xlu0 %v516, 32
        %v890 = vpop.permute.xlu0 %889
        %891 = vrot.lane.b32.xlu0 %v517, 32
        %v892 = vpop.permute.xlu0 %891
        %893 = vrot.lane.b32.xlu0 %v518, 32
        %v894 = vpop.permute.xlu0 %893
        %v900 = vsel %vm610, %v884, 0
        %v903 = vand.u32 %v894, %v616
        %905 = vmatprep.subr.bf16.mxu0 0
        %906 = vmatpush1.bf16.msra.mxu0 0
        %907 = vmatprep.subr.bf16.mxu0 0
        %908 = vmatpush1.bf16.msra.mxu0 0
        %909 = vmatprep.subr.bf16.mxu0 0
        %910 = vmatpush1.bf16.msra.mxu0 0
        %911 = vmatprep.subr.bf16.mxu0 0
        %912 = vmatpush1.bf16.msra.mxu0 %v903
        %913 = vmatprep.subr.bf16.mxu0 0
        %914 = vmatpush1.bf16.msra.mxu0 %v892
        %915 = vmatprep.subr.bf16.mxu0 0
        %916 = vmatpush1.bf16.msra.mxu0 %v890
        %917 = vmatprep.subr.bf16.mxu0 0
        %918 = vmatpush1.bf16.msra.mxu0 %v888
        %919 = vmatprep.subr.bf16.mxu0 0
        %920 = vmatpush1.bf16.msra.mxu0 %v886
        %921 = vmatprep.subr.bf16.mxu0 0
        %922 = vmatpush2.bf16.msra.mxu0 0
        %923 = vmatprep.subr.bf16.mxu0 0
        %924 = vmatpush2.bf16.msra.mxu0 0
        %925 = vmatprep.subr.bf16.mxu0 0
        %926 = vmatpush2.bf16.msra.mxu0 0
        %927 = vmatprep.subr.bf16.mxu0 0
        %928 = vmatpush2.bf16.msra.mxu0 0
        %929 = vmatprep.subr.bf16.mxu0 0
        %930 = vmatpush2.bf16.msra.mxu0 0
        %931 = vmatprep.subr.bf16.mxu0 0
        %932 = vmatpush2.bf16.msra.mxu0 0
        %933 = vmatprep.subr.bf16.mxu0 0
        %934 = vmatpush2.bf16.msra.mxu0 0
        %935 = vmatprep.subr.bf16.mxu0 0
        %936 = vmatpush2.bf16.msra.mxu0 0
        %937 = vmatprep.mubr.bf16.mxu0 0
        %938 = vmatmul.mubr.bf16.gmra.mxu0 %v900
        %v939 = vpop.f32.mrf.mxu0
        %v940 = vadd.f32 0.0, %v939
        %v941 = vpop.f32.mrf.mxu0
        %v942 = vpop.f32.mrf.mxu0
        %v943 = vpop.f32.mrf.mxu0
        %944 = vdwg.mxu0
        %945 = vrot.lane.b32.xlu0 %v513, 80
        %v946 = vpop.permute.xlu0 %945
        %947 = vrot.lane.b32.xlu0 %v514, 80
        %v948 = vpop.permute.xlu0 %947
        %949 = vrot.lane.b32.xlu0 %v515, 80
        %v950 = vpop.permute.xlu0 %949
        %951 = vrot.lane.b32.xlu0 %v516, 80
        %v952 = vpop.permute.xlu0 %951
        %953 = vrot.lane.b32.xlu0 %v517, 80
        %v954 = vpop.permute.xlu0 %953
        %955 = vrot.lane.b32.xlu0 %v518, 80
        %v956 = vpop.permute.xlu0 %955
        %v958 = vsel %vm519, %v946, 0
        %v961 = vsel %vm519, %v948, 0
        %v964 = vsel %vm519, %v950, 0
        %v967 = vsel %vm519, %v952, 0
        %v970 = vsel %vm519, %v954, 0
        %v973 = vsel %vm519, %v956, 0
        %975 = vmatprep.subr.bf16.mxu0 0
        %976 = vmatpush1.bf16.xpose.msra.mxu0 0
        %977 = vmatprep.subr.bf16.mxu0 0
        %978 = vmatpush1.bf16.xpose.msra.mxu0 0
        %979 = vmatprep.subr.bf16.mxu0 0
        %980 = vmatpush1.bf16.xpose.msra.mxu0 0
        %981 = vmatprep.subr.bf16.mxu0 0
        %982 = vmatpush1.bf16.xpose.msra.mxu0 %v973
        %983 = vmatprep.subr.bf16.mxu0 0
        %984 = vmatpush1.bf16.xpose.msra.mxu0 %v970
        %985 = vmatprep.subr.bf16.mxu0 0
        %986 = vmatpush1.bf16.xpose.msra.mxu0 %v967
        %987 = vmatprep.subr.bf16.mxu0 0
        %988 = vmatpush1.bf16.xpose.msra.mxu0 %v964
        %989 = vmatprep.subr.bf16.mxu0 0
        %990 = vmatpush1.bf16.xpose.msra.mxu0 %v961
        %991 = vmatprep.subr.bf16.mxu0 0
        %992 = vmatpush2.bf16.xpose.msra.mxu0 0
        %993 = vmatprep.subr.bf16.mxu0 0
        %994 = vmatpush2.bf16.xpose.msra.mxu0 0
        %995 = vmatprep.subr.bf16.mxu0 0
        %996 = vmatpush2.bf16.xpose.msra.mxu0 0
        %997 = vmatprep.subr.bf16.mxu0 0
        %998 = vmatpush2.bf16.xpose.msra.mxu0 0
        %999 = vmatprep.subr.bf16.mxu0 0
        %1000 = vmatpush2.bf16.xpose.msra.mxu0 0
        %1001 = vmatprep.subr.bf16.mxu0 0
        %1002 = vmatpush2.bf16.xpose.msra.mxu0 0
        %1003 = vmatprep.subr.bf16.mxu0 0
        %1004 = vmatpush2.bf16.xpose.msra.mxu0 0
        %1005 = vmatprep.subr.bf16.mxu0 0
        %1006 = vmatpush2.bf16.xpose.msra.mxu0 0
        %1007 = vmatprep.mubr.bf16.mxu0 0
        %1008 = vmatmul.mubr.bf16.gmra.mxu0 %v958
        %v1009 = vpop.f32.mrf.mxu0
        %v1010 = vadd.f32 0.0, %v1009
        %v1011 = vpop.f32.mrf.mxu0
        %v1012 = vpop.f32.mrf.mxu0
        %v1013 = vpop.f32.mrf.mxu0
        %1014 = vdwg.mxu0
        %v1015 = vsel %vm578, %v1010, -inf
        %1016 = vmax.xlane.f32.xlu0 %v1015
        %v1017 = vpop.xlane.xlu0 %1016
        %v1018 = vsub.f32 %v1010, %v1017
        %v1019 = vmul.f32 %v1018, 1.442695
        %v1020 = vpow.pop %v1019
        %v1021 = vsel %vm578, %v1020, 0.0
        %1022 = vadd.xlane.f32.xlu0 %v1021
        %v1023 = vpop.xlane.xlu0 %1022
        %v1024 = vrcp.pop %v1023
        %v1025 = vmul.f32 %v1020, %v1024
        %v1026 = vpack.c.bf16 %v1025, %v1025
        %1027 = vrot.lane.b32.xlu0 %v514, 16
        %v1028 = vpop.permute.xlu0 %1027
        %1029 = vrot.lane.b32.xlu0 %v515, 16
        %v1030 = vpop.permute.xlu0 %1029
        %1031 = vrot.lane.b32.xlu0 %v516, 16
        %v1032 = vpop.permute.xlu0 %1031
        %1033 = vrot.lane.b32.xlu0 %v517, 16
        %v1034 = vpop.permute.xlu0 %1033
        %1035 = vrot.lane.b32.xlu0 %v518, 16
        %v1036 = vpop.permute.xlu0 %1035
        %v1042 = vsel %vm610, %v1026, 0
        %v1045 = vand.u32 %v1036, %v616
        %1047 = vmatprep.subr.bf16.mxu0 0
        %1048 = vmatpush1.bf16.msra.mxu0 0
        %1049 = vmatprep.subr.bf16.mxu0 0
        %1050 = vmatpush1.bf16.msra.mxu0 0
        %1051 = vmatprep.subr.bf16.mxu0 0
        %1052 = vmatpush1.bf16.msra.mxu0 0
        %1053 = vmatprep.subr.bf16.mxu0 0
        %1054 = vmatpush1.bf16.msra.mxu0 %v1045
        %1055 = vmatprep.subr.bf16.mxu0 0
        %1056 = vmatpush1.bf16.msra.mxu0 %v1034
        %1057 = vmatprep.subr.bf16.mxu0 0
        %1058 = vmatpush1.bf16.msra.mxu0 %v1032
        %1059 = vmatprep.subr.bf16.mxu0 0
        %1060 = vmatpush1.bf16.msra.mxu0 %v1030
        %1061 = vmatprep.subr.bf16.mxu0 0
        %1062 = vmatpush1.bf16.msra.mxu0 %v1028
        %1063 = vmatprep.subr.bf16.mxu0 0
        %1064 = vmatpush2.bf16.msra.mxu0 0
        %1065 = vmatprep.subr.bf16.mxu0 0
        %1066 = vmatpush2.bf16.msra.mxu0 0
        %1067 = vmatprep.subr.bf16.mxu0 0
        %1068 = vmatpush2.bf16.msra.mxu0 0
        %1069 = vmatprep.subr.bf16.mxu0 0
        %1070 = vmatpush2.bf16.msra.mxu0 0
        %1071 = vmatprep.subr.bf16.mxu0 0
        %1072 = vmatpush2.bf16.msra.mxu0 0
        %1073 = vmatprep.subr.bf16.mxu0 0
        %1074 = vmatpush2.bf16.msra.mxu0 0
        %1075 = vmatprep.subr.bf16.mxu0 0
        %1076 = vmatpush2.bf16.msra.mxu0 0
        %1077 = vmatprep.subr.bf16.mxu0 0
        %1078 = vmatpush2.bf16.msra.mxu0 0
        %1079 = vmatprep.mubr.bf16.mxu0 0
        %1080 = vmatmul.mubr.bf16.gmra.mxu0 %v1042
        %v1081 = vpop.f32.mrf.mxu0
        %v1082 = vadd.f32 0.0, %v1081
        %v1083 = vpop.f32.mrf.mxu0
        %v1084 = vpop.f32.mrf.mxu0
        %v1085 = vpop.f32.mrf.mxu0
        %1086 = vdwg.mxu0
        %1088 = vrot.lane.b32.xlu0 %v798, 16
        %v1089 = vpop.permute.xlu0 %1088
        %1092 = vrot.lane.b32.xlu0 %v940, 32
        %v1093 = vpop.permute.xlu0 %1092
        %1096 = vrot.lane.b32.xlu0 %v1082, 48
        %v1097 = vpop.permute.xlu0 %1096
        %v1099 = vsel %vm519, %v655, %v1089
        %vm1100 = vcmask 261120
        %v1101 = vsel %vm1100, %v1099, %v1093
        %vm1102 = vcmask 392192
        %v1103 = vsel %vm1102, %v1101, %v1097
        %v1104 = vpack.c.bf16 %v1103, %v1103
        %v1105 = vld [vmem:[%s5] sm:$0xf]
        %v1106 = vld [vmem:[%s5 + $0x4] sm:$0xf]
        %v1107 = vld [vmem:[%s5 + $0x8] sm:$0xf]
        %v1108 = vld [vmem:[%s5 + $0xc] sm:$0xf]
        %v1109 = vld [vmem:[%s5 + $0x10] sm:$0xf]
        %v1110 = vld [vmem:[%s5 + $0x14] sm:$0xf]
        %v1111 = vld [vmem:[%s5 + $0x18] sm:$0xf]
        %v1112 = vld [vmem:[%s5 + $0x1c] sm:$0xf]
        %v1113 = vld [vmem:[%s6] sm:$0x1]
        %v1122 = vunpack.c.l.b16 %v1105
        %v1123 = vunpack.c.l.b16 %v1106
        %v1124 = vunpack.c.l.b16 %v1107
        %v1125 = vunpack.c.l.b16 %v1108
        %v1126 = vunpack.c.l.b16 %v1109
        %v1127 = vunpack.c.l.b16 %v1110
        %v1128 = vunpack.c.l.b16 %v1111
        %v1129 = vunpack.c.l.b16 %v1112
        %v1130 = vpack.c.b16 %v1123, %v1122
        %v1131 = vpack.c.b16 %v1125, %v1124
        %v1132 = vpack.c.b16 %v1127, %v1126
        %v1133 = vpack.c.b16 %v1129, %v1128
        %v1139 = vsel %vm348, %v1104, 0
        %1141 = vmatprep.subr.bf16.mxu0 0
        %1142 = vmatpush1.bf16.msra.mxu0 0
        %1143 = vmatprep.subr.bf16.mxu0 0
        %1144 = vmatpush1.bf16.msra.mxu0 0
        %1145 = vmatprep.subr.bf16.mxu0 0
        %1146 = vmatpush1.bf16.msra.mxu0 0
        %1147 = vmatprep.subr.bf16.mxu0 0
        %1148 = vmatpush1.bf16.msra.mxu0 0
        %1149 = vmatprep.subr.bf16.mxu0 0
        %1150 = vmatpush1.bf16.msra.mxu0 %v1133
        %1151 = vmatprep.subr.bf16.mxu0 0
        %1152 = vmatpush1.bf16.msra.mxu0 %v1132
        %1153 = vmatprep.subr.bf16.mxu0 0
        %1154 = vmatpush1.bf16.msra.mxu0 %v1131
        %1155 = vmatprep.subr.bf16.mxu0 0
        %1156 = vmatpush1.bf16.msra.mxu0 %v1130
        %1157 = vmatprep.subr.bf16.mxu0 0
        %1158 = vmatpush2.bf16.msra.mxu0 0
        %1159 = vmatprep.subr.bf16.mxu0 0
        %1160 = vmatpush2.bf16.msra.mxu0 0
        %1161 = vmatprep.subr.bf16.mxu0 0
        %1162 = vmatpush2.bf16.msra.mxu0 0
        %1163 = vmatprep.subr.bf16.mxu0 0
        %1164 = vmatpush2.bf16.msra.mxu0 0
        %1165 = vmatprep.subr.bf16.mxu0 0
        %1166 = vmatpush2.bf16.msra.mxu0 0
        %1167 = vmatprep.subr.bf16.mxu0 0
        %1168 = vmatpush2.bf16.msra.mxu0 0
        %1169 = vmatprep.subr.bf16.mxu0 0
        %1170 = vmatpush2.bf16.msra.mxu0 0
        %1171 = vmatprep.subr.bf16.mxu0 0
        %1172 = vmatpush2.bf16.msra.mxu0 0
        %1173 = vmatprep.mubr.bf16.mxu0 0
        %1174 = vmatmul.mubr.bf16.gmra.mxu0 %v1139
        %v1175 = vpop.f32.mrf.mxu0
        %v1176 = vadd.f32 %v1113, %v1175
        %v1177 = vpop.f32.mrf.mxu0
        %v1178 = vpop.f32.mrf.mxu0
        %v1179 = vpop.f32.mrf.mxu0
        %1180 = vdwg.mxu0
        %vm1181 = vcmask 253952
        %1182 = vst.msk [vmem:[%s270] sm:$0x1] %vm1181, %v1176
        %s1183 = sand.u32 %s181, 1
        %s1184 = scalar_lea.sflag [#allocation3], %s1183
        %s1185 = sand.u32 %s181, 1
        %s1186 = scalar_lea.vmem [#allocation2], %s1185
        // Predicated region
        $region49: #{attention_pool_forward.1} parent=47 // pred_check
          %p1187 = pneg %p191
        $region50: #{attention_pool_forward.1} parent=47 // pred_check_branch
          %1189 = sbr.rel (%p1187) target = $region52
        $region51: #{attention_pool_forward.1} parent=47 // pred_region
          %s1191 = ssub.s32 16, 16
          %1192 = vsyncadd %s1184, %s1191
          %s1193 = smul.addr %s21, 16
          %s1194 = scalar_lea.hbm %s7, %s1193
          %s1196 = sshll.u32 %s1186, 4
          %s1197 = int_to_ptr.vmem [resolvable:$true] %s1196
          %1199 = dma.vmem_to_hbm [thread:$0]  %s1197, 16, %s1194, %s1184
        $region52: #{attention_pool_forward.1} parent=47 // pred_fallthru
          _
      $region48: #{attention_pool_forward.1} parent=5 // pred_fallthru
        _
      %p1200 = scmp.le.s32.totalorder 2, %s16
      // Predicated region
      $region53: #{attention_pool_forward.1} parent=5 // pred_check
        %p1201 = pneg %p1200
      $region54: #{attention_pool_forward.1} parent=5 // pred_check_branch
        %1203 = sbr.rel (%p1201) target = $region56
      $region55: #{attention_pool_forward.1} parent=5 // pred_region
        %s1204 = ssub.s32 %s16, 2
        // Predicated region
        $region57: #{attention_pool_forward.1} parent=55 // pred_check
          %p1205 = pneg %p197
        $region58: #{attention_pool_forward.1} parent=55 // pred_check_branch
          %1207 = sbr.rel (%p1205) target = $region60
        $region59: #{attention_pool_forward.1} parent=55 // pred_region
          %s1208 = sand.u32 %s182, 1
          %s1209 = scalar_lea.sflag [#allocation3], %s1208
          %s1210 = sand.u32 %s182, 1
          %s1211 = scalar_lea.vmem [#allocation2], %s1210
          %1212 = dma.done %s1209, 16
        $region60: #{attention_pool_forward.1} parent=55 // pred_fallthru
          _
      $region56: #{attention_pool_forward.1} parent=5 // pred_fallthru
        _
    $region6: #{attention_pool_forward.1} parent=1 // loop_footer
      %s20 = sadd.s32 1, %s16
    $region7: #{attention_pool_forward.1} parent=1 // loop_footer_branch
      %15 = sbr.rel target = $region3
    $region8: #{attention_pool_forward.1} parent=1 // loop_exit
      _
    %1213 = vsyncpa [#allocation3], 1
    %s1214 = scalar_lea.sflag [#allocation3], 1
    %1215 = vsyncpa %s1214, 1

</llo_original>
